<compile_context>
chip_gen: v7x
topology: tpu7x:2x2x1
jax: 0.10.0
libtpu: 0.0.40
codegen_flags: <defaults>
</compile_context>

<pallas_src>
import jax
import jax.numpy as jnp
from jax.experimental import pallas as pl
from jax.experimental.pallas import tpu as pltpu


def _stack_n_linear_kernel(x_ref, w_ref, corr_ref, b_ref, o_ref):
    """out[b] = W @ x[b] + (1 - rowsum(W)) * x[b, -1, :] + bias

    x_ref    : (TILE_B, L, TILE_N) -- lookback windows, series on lanes
    w_ref    : (H, L)              -- nn.Linear weight (PyTorch layout), VMEM-resident
    corr_ref : (H, 1)              -- 1 - rowsum(W), VMEM-resident
    b_ref    : (H, 1)              -- bias column, VMEM-resident
    o_ref    : (TILE_B, H, TILE_N) -- forecast, already in (B, H, N) layout
    """
    tile_b, L, _ = x_ref.shape
    w = w_ref[...]        # (H, L)  small, stays in vregs
    corr = corr_ref[...]  # (H, 1)
    bias = b_ref[...]     # (H, 1)

    # Static (fully unrolled) loop over the batch sub-tile; each iteration is
    # one MXU matmul + a VPU epilogue committed straight to the output block.
    for i in range(tile_b):
        last = x_ref[i, L - 1:L, :]                                    # (1, TILE_N)
        y = jnp.dot(w, x_ref[i], preferred_element_type=jnp.float32)   # (H, TILE_N) MXU
        o_ref[i] = (y + corr * last + bias).astype(o_ref.dtype)        # VPU


def reference_forward(x, weight, bias):
    """Pure-JAX reference replicating the PyTorch module forward."""
    seq_last = x[:, -1:, :]                      # (B, 1, N)
    xc = x - seq_last
    xc = jnp.transpose(xc, (0, 2, 1))            # (B, N, L)
    y = jnp.einsum("bnl,hl->bnh", xc, weight) + bias
    y = jnp.transpose(y, (0, 2, 1))              # (B, H, N)
    return y + seq_last


def stack_n_linear_forward(x, weight, bias, *, tile_b=None, tile_n=None,
                           force_pallas=False):
    """x: (B, L, N); weight: (H, L) [PyTorch layout]; bias: (H,). Returns (B, H, N)."""
    B, L, N = x.shape
    H = weight.shape[0]

    # Tiny-N regime: <128 lanes -> masked stores + launch overhead dominate;
    # plain XLA fusion wins, so dispatch to the reference unless forced.
    if N < 128 and not force_pallas:
        return reference_forward(x, weight, bias)

    itemsize = jnp.dtype(x.dtype).itemsize

    if tile_n is None:
        # Full extent when it fits (always layout-legal), else 128-multiple tiles.
        tile_n = N if N <= 2048 else 2048
    if tile_b is None:
        # Size the batch tile so one in+out block is ~4 MiB: big enough to
        # amortize the fixed grid-step cost, small enough that double-buffered
        # blocks fit comfortably in scoped VMEM on every generation.
        target_bytes = 4 * 1024 * 1024
        per_batch_bytes = (L + H) * tile_n * itemsize
        tile_b = int(max(1, min(B, target_bytes // max(per_batch_bytes, 1), 32)))
    # v7x megacore: keep the parallel grid with >= 2 steps when B allows it.
    if B >= 2 and pl.cdiv(B, tile_b) == 1 and pl.cdiv(N, tile_n) == 1:
        tile_b = pl.cdiv(B, 2)

    grid = (pl.cdiv(B, tile_b), pl.cdiv(N, tile_n))

    # Rank-1 correction: W@(x - last) + b + last == W@x + (1 - rowsum(W))*last + b.
    corr_col = (1.0 - jnp.sum(weight.astype(jnp.float32), axis=1, keepdims=True))
    bias_col = bias.reshape(H, 1).astype(jnp.float32)

    # Explicit VMEM budget: double-buffered x/out blocks + resident params,
    # with headroom; capped well under v7x's 64 MiB physical per-TC VMEM.
    x_block_bytes = tile_b * L * tile_n * itemsize
    o_block_bytes = tile_b * H * tile_n * itemsize
    vmem_limit = int(min(48 * 1024 * 1024,
                         max(16 * 1024 * 1024,
                             3 * (x_block_bytes + o_block_bytes))))

    cost = pl.CostEstimate(
        flops=2 * B * H * L * N,
        bytes_accessed=(B * L * N + B * H * N) * itemsize + (H * L + 2 * H) * 4,
        transcendentals=0)

    return pl.pallas_call(
        _stack_n_linear_kernel,
        out_shape=jax.ShapeDtypeStruct((B, H, N), x.dtype),
        grid=grid,
        in_specs=[
            pl.BlockSpec((tile_b, L, tile_n), lambda bi, j: (bi, 0, j)),
            pl.BlockSpec((H, L), lambda bi, j: (0, 0)),   # resident across all steps
            pl.BlockSpec((H, 1), lambda bi, j: (0, 0)),   # resident across all steps
            pl.BlockSpec((H, 1), lambda bi, j: (0, 0)),   # resident across all steps
        ],
        out_specs=pl.BlockSpec((tile_b, H, tile_n), lambda bi, j: (bi, 0, j)),
        compiler_params=pltpu.CompilerParams(
            dimension_semantics=("parallel", "parallel"),
            vmem_limit_bytes=vmem_limit),
        cost_estimate=cost,
    )(x, weight, corr_col, bias_col)


if __name__ == "__main__":
    # Module hyperparameters (small, consistent with the forward pass).
    lookback_w = 32
    forecast_horizon = 16
    batch = 2
    num_series = 256   # lane-dense primary check (multiple of 128)
    # num_blocks / d_ffn / dropout only create identity blocks + unused params.

    key = jax.random.PRNGKey(0)
    k_x, k_w, k_b, k_x2, k_x3 = jax.random.split(key, 5)

    # Deterministic parameter init (output_l: Linear(lookback_w, forecast_horizon)).
    bound = 1.0 / (lookback_w ** 0.5)
    weight = jax.random.uniform(
        k_w, (forecast_horizon, lookback_w), jnp.float32, -bound, bound)
    bias = jax.random.uniform(
        k_b, (forecast_horizon,), jnp.float32, -bound, bound)

    # Primary check: lane-dense path through the Pallas kernel.
    x = jax.random.normal(k_x, (batch, lookback_w, num_series), jnp.float32)
    out = jax.block_until_ready(stack_n_linear_forward(x, weight, bias))
    ref = reference_forward(x, weight, bias)
    assert out.shape == (batch, forecast_horizon, num_series)
    assert jnp.allclose(out, ref, atol=1e-5, rtol=1e-5), "mismatch (lane-dense)"

    # Ragged batch tile + non-128-multiple N (full-extent lane block).
    x2 = jax.random.normal(k_x2, (5, lookback_w, 600), jnp.float32)
    out2 = jax.block_until_ready(
        stack_n_linear_forward(x2, weight, bias, tile_b=2))
    assert out2.shape == (5, forecast_horizon, 600)
    assert jnp.allclose(out2, reference_forward(x2, weight, bias),
                        atol=1e-5, rtol=1e-5), "mismatch (ragged tiles)"

    # Tiny-N shape like the module demo (num_series=4): forced kernel path and
    # the default pure-JAX fallback path both verified.
    x3 = jax.random.normal(k_x3, (batch, lookback_w, 4), jnp.float32)
    out3 = jax.block_until_ready(
        stack_n_linear_forward(x3, weight, bias, force_pallas=True))
    assert jnp.allclose(out3, reference_forward(x3, weight, bias),
                        atol=1e-5, rtol=1e-5), "mismatch (tiny-N kernel)"
    out3f = jax.block_until_ready(stack_n_linear_forward(x3, weight, bias))
    assert jnp.allclose(out3f, reference_forward(x3, weight, bias),
                        atol=1e-5, rtol=1e-5), "mismatch (tiny-N fallback)"

    print("KERNEL_OK")
</pallas_src>

<mosaic_0001>
module attributes {stable_mosaic.version = 11 : i64} {
  func.func @_stack_n_linear_kernel(%arg0: i32, %arg1: i32, %arg2: memref<1x32x256xf32, #tpu.memory_space<vmem>>, %arg3: memref<16x32xf32, #tpu.memory_space<vmem>>, %arg4: memref<16x1xf32, #tpu.memory_space<vmem>>, %arg5: memref<16x1xf32, #tpu.memory_space<vmem>>, %arg6: memref<1x16x256xf32, #tpu.memory_space<vmem>>) attributes {dimension_semantics = [#tpu.dimension_semantics<parallel>, #tpu.dimension_semantics<parallel>], iteration_bounds = array<i64: 2, 1>, scalar_prefetch = 0 : i64, scratch_operands = 0 : i64, tpu.core_type = #tpu.core_type<tc>, window_params = [{transform_indices = @transform_0, window_bounds = array<i64: 1, 32, 256>}, {pipeline_mode = #tpu.pipeline_mode<synchronous>, transform_indices = @transform_1, window_bounds = array<i64: 16, 32>}, {pipeline_mode = #tpu.pipeline_mode<synchronous>, transform_indices = @transform_2, window_bounds = array<i64: 16, 1>}, {pipeline_mode = #tpu.pipeline_mode<synchronous>, transform_indices = @transform_3, window_bounds = array<i64: 16, 1>}, {transform_indices = @transform_4, window_bounds = array<i64: 1, 16, 256>}]} {
    %c0 = arith.constant 0 : index
    %c0_0 = arith.constant 0 : index
    %0 = vector.load %arg3[%c0, %c0_0] : memref<16x32xf32, #tpu.memory_space<vmem>>, vector<16x32xf32>
    %c0_1 = arith.constant 0 : index
    %c0_2 = arith.constant 0 : index
    %1 = vector.load %arg4[%c0_1, %c0_2] : memref<16x1xf32, #tpu.memory_space<vmem>>, vector<16x1xf32>
    %c0_3 = arith.constant 0 : index
    %c0_4 = arith.constant 0 : index
    %2 = vector.load %arg5[%c0_3, %c0_4] : memref<16x1xf32, #tpu.memory_space<vmem>>, vector<16x1xf32>
    %c0_5 = arith.constant 0 : index
    %c31 = arith.constant 31 : index
    %c0_6 = arith.constant 0 : index
    %3 = vector.load %arg2[%c0_5, %c31, %c0_6] : memref<1x32x256xf32, #tpu.memory_space<vmem>>, vector<1x1x256xf32>
    %4 = vector.shape_cast %3 : vector<1x1x256xf32> to vector<1x256xf32>
    %c0_7 = arith.constant 0 : index
    %c0_8 = arith.constant 0 : index
    %c0_9 = arith.constant 0 : index
    %5 = vector.load %arg2[%c0_7, %c0_8, %c0_9] : memref<1x32x256xf32, #tpu.memory_space<vmem>>, vector<1x32x256xf32>
    %6 = vector.shape_cast %5 : vector<1x32x256xf32> to vector<32x256xf32>
    %cst = arith.constant dense<0.000000e+00> : vector<16x256xf32>
    %7 = tpu.matmul %0, %6, %cst {dimension_numbers = #tpu.dot_dimension_numbers<[1], [0], [0], [1], [0, 0, 1, 1], [], []>} : vector<16x32xf32>, vector<32x256xf32>, vector<16x256xf32> -> vector<16x256xf32>
    %8 = vector.broadcast %1 : vector<16x1xf32> to vector<16x256xf32>
    %9 = vector.broadcast %4 : vector<1x256xf32> to vector<16x256xf32>
    %10 = arith.mulf %8, %9 : vector<16x256xf32>
    %11 = arith.addf %7, %10 : vector<16x256xf32>
    %12 = vector.broadcast %2 : vector<16x1xf32> to vector<16x256xf32>
    %13 = arith.addf %11, %12 : vector<16x256xf32>
    %c0_10 = arith.constant 0 : index
    %c0_11 = arith.constant 0 : index
    %c0_12 = arith.constant 0 : index
    %14 = vector.load %arg6[%c0_10, %c0_11, %c0_12] : memref<1x16x256xf32, #tpu.memory_space<vmem>>, vector<1x16x256xf32>
    %15 = vector.shape_cast %14 : vector<1x16x256xf32> to vector<16x256xf32>
    %16 = vector.shape_cast %13 : vector<16x256xf32> to vector<1x16x256xf32>
    tpu.vector_store %arg6[%c0_10, %c0_11, %c0_12], %16 {strides = array<i32>} : memref<1x16x256xf32, #tpu.memory_space<vmem>>, vector<1x16x256xf32>,
    return
  }
  func.func @transform_0(%arg0: i32, %arg1: i32) -> (i32, i32, i32) {
    %c0_i32 = arith.constant 0 : i32
    %c0_i32_0 = arith.constant 0 : i32
    return %arg0, %c0_i32, %arg1 : i32, i32, i32
  }
  func.func @transform_1(%arg0: i32, %arg1: i32) -> (i32, i32) {
    %c0_i32 = arith.constant 0 : i32
    %c0_i32_0 = arith.constant 0 : i32
    %c0_i32_1 = arith.constant 0 : i32
    return %c0_i32, %c0_i32_0 : i32, i32
  }
  func.func @transform_2(%arg0: i32, %arg1: i32) -> (i32, i32) {
    %c0_i32 = arith.constant 0 : i32
    %c0_i32_0 = arith.constant 0 : i32
    %c0_i32_1 = arith.constant 0 : i32
    return %c0_i32, %c0_i32_0 : i32, i32
  }
  func.func @transform_3(%arg0: i32, %arg1: i32) -> (i32, i32) {
    %c0_i32 = arith.constant 0 : i32
    %c0_i32_0 = arith.constant 0 : i32
    %c0_i32_1 = arith.constant 0 : i32
    return %c0_i32, %c0_i32_0 : i32, i32
  }
  func.func @transform_4(%arg0: i32, %arg1: i32) -> (i32, i32, i32) {
    %c0_i32 = arith.constant 0 : i32
    %c0_i32_0 = arith.constant 0 : i32
    return %arg0, %c0_i32, %arg1 : i32, i32, i32
  }
}

</mosaic_0001>

<llo_original>
// kernel: tpu_custom_call.1
$region0: #{tpu_custom_call.1}
  #allocation0 [shape = 'u32[]', space=smem, size = 0x4, offset = 0x4, fixed_abs, tag = 'smem constant byte address 0x4 - core index']
  #allocation1 [shape = 'u32[144,128]{1,0:T(1,128)}', space=vmem, size = 0x12000, scoped, tag = 'internal scratch']
  %s0 = inlined_call_operand.hbm [shape: f32[2,32,256], index: 0, kind: input, shape index: {}]
  %s1 = inlined_call_operand.vmem [shape: f32[16,32], index: 1, kind: input, shape index: {}]
  %s2 = inlined_call_operand.vmem [shape: f32[16,1], index: 2, kind: input, shape index: {}]
  %s3 = inlined_call_operand.vmem [shape: f32[16,1], index: 3, kind: input, shape index: {}]
  %s4 = inlined_call_operand.hbm [shape: f32[2,16,256], index: 4, kind: output, shape index: {}]
  %s5 = sld [smem:[#allocation0]]
  $region53: #{tpu_custom_call.1} parent=0
    _
  %s7 = ssub.s32 1, %s5
  %s8 = scalar_select 0, %s7, %s5
  $region1: #{tpu_custom_call.1} parent=0
    #allocation2 [shape = 'u8[65536]{0}', space=vmem, size = 0x10000, scoped, tag = 'input window, operand 0']
    #allocation3 [shape = 's32[2]{0}', space=sflag, size = 0x8, scoped, tag = 'scoped memory for tpu_custom_call.1']
    #allocation4 [shape = 's32[2]{0}', space=sflag, size = 0x8, scoped, tag = 'scoped memory for tpu_custom_call.1']
    #allocation5 [shape = 'u8[32768]{0}', space=vmem, size = 0x8000, scoped, tag = 'output window, operand 0']
    %9 = vsyncpa [#allocation3], 0
    %s10 = scalar_lea.sflag [#allocation3], 1
    %11 = vsyncpa %s10, 0
    %12 = vsyncpa [#allocation4], 0
    %s13 = scalar_lea.sflag [#allocation4], 1
    %14 = vsyncpa %s13, 0
    loop: start=0, step=1, limit=4
    $region2: #{tpu_custom_call.1} parent=1 // loop_pre_header
      _
    $region3: #{tpu_custom_call.1} parent=1 // loop_header
      %s16 = sphi 0, %s20
      %p17 = scmp.ge.s32.totalorder %s16, 4
      %s23 = sphi 0, %s35
      %s24 = sphi 0, %s31
      %s25 = sphi 0, %s23
      %s26 = sphi 0, %s24
      %s27 = sphi 0, %s25
      %s28 = sphi 0, %s26
      %s40 = sphi 0, %s42
      %s43 = sphi 0, %s40
      %s44 = sphi 0, %s43
      %s60 = sphi 0, %s44
      %s64 = sphi 0, %s64
      %s66 = sphi 0, %s64
      %s67 = sphi 0, %s66
      %s81 = sphi 0, %s67
      %s85 = sphi 0, %s85
      %s87 = sphi 0, %s85
      %s88 = sphi 0, %s87
      %s102 = sphi 0, %s88
      %s106 = sphi 0, %s106
      %s108 = sphi 0, %s106
      %s109 = sphi 0, %s108
      %s123 = sphi 0, %s109
      %s131 = sphi 0, %s133
      %s134 = sphi 0, %s131
      %s135 = sphi 0, %s134
      %s151 = sphi 0, %s135
    $region4: #{tpu_custom_call.1} parent=1 // loop_header_branch
      %19 = sbr.rel (%p17) target = $region8
    $region5: #{tpu_custom_call.1} parent=1 // loop_body
      %s21 = ssub.s32 %s16, 1
      %s22 = ssub.s32 %s16, 2
      %s29 = sadd.s32 1, %s24
      %p30 = scmp.ge.s32.totalorder %s29, 1
      %s31 = scalar_select %p30, 0, %s29
      %s32 = sadd.s32 1, %s23
      %s33 = scalar_select %p30, %s32, %s23
      %p34 = scmp.ge.s32.totalorder %s33, 2
      %s35 = scalar_select %p34, 0, %s33
      %s36 = ssub.s32 %s23, %s35
      %s37 = ssub.s32 %s24, %s31
      %s38 = sor.u32 %s36, %s37
      %p39 = scmp.eq.s32.totalorder %s38, 0
      %s41 = sadd.s32 %s40, 1
      %s42 = scalar_select %p39, %s40, %s41
      %p45 = pneg %p39
      %p46 = scmp.eq.s32.totalorder %s16, 1
      %p47 = por %p45, %p46
      %p48 = scmp.ne.s32.totalorder %s40, %s43
      %p49 = scmp.eq.s32.totalorder %s16, 0
      %p50 = por %p48, %p49
      %p51 = scmp.ne.s32.totalorder %s40, %s43
      %p52 = scmp.eq.s32.totalorder %s21, 1
      %p53 = por %p51, %p52
      %p54 = scmp.ne.s32.totalorder %s43, %s44
      %p55 = scmp.eq.s32.totalorder %s21, 0
      %p56 = por %p54, %p55
      %p57 = scmp.ne.s32.totalorder %s43, %s44
      %p58 = scmp.eq.s32.totalorder %s22, 1
      %p59 = por %p57, %p58
      %p61 = scmp.ne.s32.totalorder %s44, %s60
      %p62 = scmp.eq.s32.totalorder %s22, 0
      %p63 = por %p61, %p62
      %s65 = sadd.s32 %s64, 1
      %p68 = scmp.eq.s32.totalorder %s16, 1
      %p69 = scmp.ne.s32.totalorder %s64, %s66
      %p70 = scmp.eq.s32.totalorder %s16, 0
      %p71 = por %p69, %p70
      %p72 = scmp.ne.s32.totalorder %s64, %s66
      %p73 = scmp.eq.s32.totalorder %s21, 1
      %p74 = por %p72, %p73
      %p75 = scmp.ne.s32.totalorder %s66, %s67
      %p76 = scmp.eq.s32.totalorder %s21, 0
      %p77 = por %p75, %p76
      %p78 = scmp.ne.s32.totalorder %s66, %s67
      %p79 = scmp.eq.s32.totalorder %s22, 1
      %p80 = por %p78, %p79
      %p82 = scmp.ne.s32.totalorder %s67, %s81
      %p83 = scmp.eq.s32.totalorder %s22, 0
      %p84 = por %p82, %p83
      %s86 = sadd.s32 %s85, 1
      %p89 = scmp.eq.s32.totalorder %s16, 1
      %p90 = scmp.ne.s32.totalorder %s85, %s87
      %p91 = scmp.eq.s32.totalorder %s16, 0
      %p92 = por %p90, %p91
      %p93 = scmp.ne.s32.totalorder %s85, %s87
      %p94 = scmp.eq.s32.totalorder %s21, 1
      %p95 = por %p93, %p94
      %p96 = scmp.ne.s32.totalorder %s87, %s88
      %p97 = scmp.eq.s32.totalorder %s21, 0
      %p98 = por %p96, %p97
      %p99 = scmp.ne.s32.totalorder %s87, %s88
      %p100 = scmp.eq.s32.totalorder %s22, 1
      %p101 = por %p99, %p100
      %p103 = scmp.ne.s32.totalorder %s88, %s102
      %p104 = scmp.eq.s32.totalorder %s22, 0
      %p105 = por %p103, %p104
      %s107 = sadd.s32 %s106, 1
      %p110 = scmp.eq.s32.totalorder %s16, 1
      %p111 = scmp.ne.s32.totalorder %s106, %s108
      %p112 = scmp.eq.s32.totalorder %s16, 0
      %p113 = por %p111, %p112
      %p114 = scmp.ne.s32.totalorder %s106, %s108
      %p115 = scmp.eq.s32.totalorder %s21, 1
      %p116 = por %p114, %p115
      %p117 = scmp.ne.s32.totalorder %s108, %s109
      %p118 = scmp.eq.s32.totalorder %s21, 0
      %p119 = por %p117, %p118
      %p120 = scmp.ne.s32.totalorder %s108, %s109
      %p121 = scmp.eq.s32.totalorder %s22, 1
      %p122 = por %p120, %p121
      %p124 = scmp.ne.s32.totalorder %s109, %s123
      %p125 = scmp.eq.s32.totalorder %s22, 0
      %p126 = por %p124, %p125
      %s127 = ssub.s32 %s23, %s35
      %s128 = ssub.s32 %s24, %s31
      %s129 = sor.u32 %s127, %s128
      %p130 = scmp.eq.s32.totalorder %s129, 0
      %s132 = sadd.s32 %s131, 1
      %s133 = scalar_select %p130, %s131, %s132
      %p136 = pneg %p130
      %p137 = scmp.eq.s32.totalorder %s16, 1
      %p138 = por %p136, %p137
      %p139 = scmp.ne.s32.totalorder %s131, %s134
      %p140 = scmp.eq.s32.totalorder %s16, 0
      %p141 = por %p139, %p140
      %p142 = scmp.ne.s32.totalorder %s131, %s134
      %p143 = scmp.eq.s32.totalorder %s21, 1
      %p144 = por %p142, %p143
      %p145 = scmp.ne.s32.totalorder %s134, %s135
      %p146 = scmp.eq.s32.totalorder %s21, 0
      %p147 = por %p145, %p146
      %p148 = scmp.ne.s32.totalorder %s134, %s135
      %p149 = scmp.eq.s32.totalorder %s22, 1
      %p150 = por %p148, %p149
      %p152 = scmp.ne.s32.totalorder %s135, %s151
      %p153 = scmp.eq.s32.totalorder %s22, 0
      %p154 = por %p152, %p153
      %p155 = scmp.le.s32.totalorder 1, %s16
      %p156 = scmp.lt.s32.totalorder %s16, 3
      %p157 = pnand %p155, %p156
      %p158 = pneg %p157
      // Predicated region
      $region9: #{tpu_custom_call.1} parent=5 // pred_check
        _
      $region10: #{tpu_custom_call.1} parent=5 // pred_check_branch
        %160 = sbr.rel (%p157) target = $region12
      $region11: #{tpu_custom_call.1} parent=5 // pred_region
        %s161 = ssub.s32 %s16, 1
        // Predicated region
        $region13: #{tpu_custom_call.1} parent=11 // pred_check
          %p162 = pneg %p77
        $region14: #{tpu_custom_call.1} parent=11 // pred_check_branch
          %164 = sbr.rel (%p162) target = $region16
        $region15: #{tpu_custom_call.1} parent=11 // pred_region
          _
        $region16: #{tpu_custom_call.1} parent=11 // pred_fallthru
          _
        // Predicated region
        $region17: #{tpu_custom_call.1} parent=11 // pred_check
          %p165 = pneg %p98
        $region18: #{tpu_custom_call.1} parent=11 // pred_check_branch
          %167 = sbr.rel (%p165) target = $region20
        $region19: #{tpu_custom_call.1} parent=11 // pred_region
          _
        $region20: #{tpu_custom_call.1} parent=11 // pred_fallthru
          _
        // Predicated region
        $region21: #{tpu_custom_call.1} parent=11 // pred_check
          %p168 = pneg %p119
        $region22: #{tpu_custom_call.1} parent=11 // pred_check_branch
          %170 = sbr.rel (%p168) target = $region24
        $region23: #{tpu_custom_call.1} parent=11 // pred_region
          _
        $region24: #{tpu_custom_call.1} parent=11 // pred_fallthru
          _
      $region12: #{tpu_custom_call.1} parent=5 // pred_fallthru
        _
      %p171 = scmp.lt.s32.totalorder %s16, 2
      // Predicated region
      $region25: #{tpu_custom_call.1} parent=5 // pred_check
        %p172 = pneg %p171
      $region26: #{tpu_custom_call.1} parent=5 // pred_check_branch
        %174 = sbr.rel (%p172) target = $region28
      $region27: #{tpu_custom_call.1} parent=5 // pred_region
        // Predicated region
        $region29: #{tpu_custom_call.1} parent=27 // pred_check
          %p175 = pneg %p50
        $region30: #{tpu_custom_call.1} parent=27 // pred_check_branch
          %177 = sbr.rel (%p175) target = $region32
        $region31: #{tpu_custom_call.1} parent=27 // pred_region
          %s178 = sand.u32 %s40, 1
          %s179 = scalar_lea.sflag [#allocation3], %s178
          %s180 = sand.u32 %s40, 1
          %s181 = smul.addr %s180, 64
          %s182 = scalar_lea.vmem [#allocation2], %s181
          %s183 = smul.u32 2, %s24
          %s185 = ssub.s32 1024, 1024
          %186 = vsyncadd %s179, %s185
          %s187 = smul.addr %s23, 8
          %s188 = sadd.s32 %s183, %s187
          %s189 = smul.addr %s188, 128
          %s190 = scalar_lea.hbm %s0, %s189
          %s191 = sshll.u32 %s182, 4
          %s192 = int_to_ptr.vmem [resolvable:$true] %s191
          %197 = dma.hbm_to_vmem [thread:$0]  %s190, 1024, %s192, %s179, 256, 256, 16
        $region32: #{tpu_custom_call.1} parent=27 // pred_fallthru
          _
      $region28: #{tpu_custom_call.1} parent=5 // pred_fallthru
        _
      %p198 = scmp.le.s32.totalorder 1, %s16
      %p199 = scmp.lt.s32.totalorder %s16, 3
      %p200 = pnand %p198, %p199
      %p201 = pneg %p200
      // Predicated region
      $region33: #{tpu_custom_call.1} parent=5 // pred_check
        _
      $region34: #{tpu_custom_call.1} parent=5 // pred_check_branch
        %203 = sbr.rel (%p200) target = $region36
      $region35: #{tpu_custom_call.1} parent=5 // pred_region
        %s204 = ssub.s32 %s16, 1
        %s205 = sand.u32 %s43, 1
        %s206 = scalar_lea.sflag [#allocation3], %s205
        %s207 = sand.u32 %s43, 1
        %s208 = smul.addr %s207, 64
        %s209 = scalar_lea.vmem [#allocation2], %s208
        // Predicated region
        $region37: #{tpu_custom_call.1} parent=35 // pred_check
          %p210 = pneg %p56
        $region38: #{tpu_custom_call.1} parent=35 // pred_check_branch
          %212 = sbr.rel (%p210) target = $region40
        $region39: #{tpu_custom_call.1} parent=35 // pred_region
          %213 = dma.done %s206, 1024
        $region40: #{tpu_custom_call.1} parent=35 // pred_fallthru
          _
        %s214 = sand.u32 %s43, 1
        %s215 = scalar_lea.sflag [#allocation3], %s214
        %s216 = sand.u32 %s43, 1
        %s217 = smul.addr %s216, 64
        %s218 = scalar_lea.vmem [#allocation2], %s217
        %p219 = pneg %p56
        %p220 = pneg %p53
        %p221 = pneg %p77
        %p222 = pneg %p74
        %p223 = pneg %p98
        %p224 = pneg %p95
        %p225 = pneg %p119
        %p226 = pneg %p116
        %p227 = pneg %p147
        %p228 = pneg %p144
        %s229 = sand.u32 %s134, 1
        %s230 = scalar_lea.sflag [#allocation4], %s229
        %s231 = sand.u32 %s134, 1
        %s232 = smul.addr %s231, 32
        %s233 = scalar_lea.vmem [#allocation5], %s232
        %s234 = smul.u32 2, %s26
        %s235 = smul.u32 2, %s26
        %v236 = vld [vmem:[%s1] sm:$0xff]
        %v237 = vld [vmem:[%s1 + $0x8] sm:$0xff]
        %v238 = vld [vmem:[%s2] sm:$0xff]
        %v239 = vld [vmem:[%s2 + $0x8] sm:$0xff]
        %v240 = vld [vmem:[%s3] sm:$0xff]
        %v241 = vld [vmem:[%s3 + $0x8] sm:$0xff]
        %s242 = scalar_lea.vmem %s209, 55 [#allocation2]
        %v243 = vld [vmem:[%s242] ss:$8 sm:$0x3]
        %v244 = vld [vmem:[%s209] sm:$0xff]
        %v245 = vld [vmem:[%s209 + $0x8] sm:$0xff]
        %v246 = vld [vmem:[%s209 + $0x10] sm:$0xff]
        %v247 = vld [vmem:[%s209 + $0x18] sm:$0xff]
        %v248 = vld [vmem:[%s209 + $0x20] sm:$0xff]
        %v249 = vld [vmem:[%s209 + $0x28] sm:$0xff]
        %v250 = vld [vmem:[%s209 + $0x30] sm:$0xff]
        %v251 = vld [vmem:[%s209 + $0x38] sm:$0xff]
        %253 = vset.pattern.permute.xlu0 0
        %254 = vperm.xlu0 %253, %v238
        %v255 = vpop.permute.xlu0 %254
        %258 = vset.pattern.permute.xlu0 0
        %259 = vperm.xlu0 %258, %v239
        %v260 = vpop.permute.xlu0 %259
        %v263 = vlaneseq
        %v264 = vshrl.u32 %v263, 7
        %v265 = vsub.s32 0, %v264
        %v266 = vrot.slane %v243, %v265
        %v267 = vlaneseq
        %v268 = vshrl.u32 %v267, 7
        %v269 = vsub.s32 1, %v268
        %v270 = vrot.slane %v243, %v269
        %v273 = vmul.f32 %v255, %v266
        %v274 = vmul.f32 %v255, %v270
        %v275 = vmul.f32 %v260, %v266
        %v276 = vmul.f32 %v260, %v270
        %vm277 = vcmask 261120
        %v279 = vsel %vm277, %v236, 0
        %v282 = vsel %vm277, %v237, 0
        %284 = vmatprep.subr.mxu0 %v245
        %285 = vmatpush1.msra.mxu0 %v244
        %286 = vmatprep.subr.mxu0 %v247
        %287 = vmatpush1.msra.mxu0 %v246
        %288 = vmatprep.subr.mxu0 %v249
        %289 = vmatpush1.msra.mxu0 %v248
        %290 = vmatprep.subr.mxu0 %v251
        %291 = vmatpush1.msra.mxu0 %v250
        %292 = vmatprep.subr.mxu0 0.0
        %293 = vmatpush1.msra.mxu0 0.0
        %294 = vmatprep.subr.mxu0 0.0
        %295 = vmatpush1.msra.mxu0 0.0
        %296 = vmatprep.subr.mxu0 0.0
        %297 = vmatpush1.msra.mxu0 0.0
        %298 = vmatprep.subr.mxu0 0.0
        %299 = vmatpush1.msra.mxu0 0.0
        %300 = vmatprep.subr.mxu0 0.0
        %301 = vmatpush1.msra.mxu0 0.0
        %302 = vmatprep.subr.mxu0 0.0
        %303 = vmatpush1.msra.mxu0 0.0
        %304 = vmatprep.subr.mxu0 0.0
        %305 = vmatpush1.msra.mxu0 0.0
        %306 = vmatprep.subr.mxu0 0.0
        %307 = vmatpush1.msra.mxu0 0.0
        %308 = vmatprep.subr.mxu0 0.0
        %309 = vmatpush1.msra.mxu0 0.0
        %310 = vmatprep.subr.mxu0 0.0
        %311 = vmatpush1.msra.mxu0 0.0
        %312 = vmatprep.subr.mxu0 0.0
        %313 = vmatpush1.msra.mxu0 0.0
        %314 = vmatprep.subr.mxu0 0.0
        %315 = vmatpush1.msra.mxu0 0.0
        %316 = vmatprep.subr.mxu0 0.0
        %317 = vmatpush1.msra.mxu0 0.0
        %318 = vmatprep.subr.mxu0 0.0
        %319 = vmatpush1.msra.mxu0 0.0
        %320 = vmatprep.subr.mxu0 0.0
        %321 = vmatpush1.msra.mxu0 0.0
        %322 = vmatprep.subr.mxu0 0.0
        %323 = vmatpush1.msra.mxu0 0.0
        %324 = vmatprep.subr.mxu0 0.0
        %325 = vmatpush1.msra.mxu0 0.0
        %326 = vmatprep.subr.mxu0 0.0
        %327 = vmatpush1.msra.mxu0 0.0
        %328 = vmatprep.subr.mxu0 0.0
        %329 = vmatpush1.msra.mxu0 0.0
        %330 = vmatprep.subr.mxu0 0.0
        %331 = vmatpush1.msra.mxu0 0.0
        %332 = vmatprep.subr.mxu0 0.0
        %333 = vmatpush1.msra.mxu0 0.0
        %334 = vmatprep.subr.mxu0 0.0
        %335 = vmatpush1.msra.mxu0 0.0
        %336 = vmatprep.subr.mxu0 0.0
        %337 = vmatpush1.msra.mxu0 0.0
        %338 = vmatprep.subr.mxu0 0.0
        %339 = vmatpush1.msra.mxu0 0.0
        %340 = vmatprep.subr.mxu0 0.0
        %341 = vmatpush1.msra.mxu0 0.0
        %342 = vmatprep.subr.mxu0 0.0
        %343 = vmatpush1.msra.mxu0 0.0
        %344 = vmatprep.subr.mxu0 0.0
        %345 = vmatpush1.msra.mxu0 0.0
        %346 = vmatprep.subr.mxu0 0.0
        %347 = vmatpush1.msra.mxu0 0.0
        %348 = vmatprep.mubr.f32.mxu0 0.0
        %349 = vmatmul.mubr.f32.gmra.mrb[0].mxu0 %v279
        %v350 = vpop.f32.mrb[0].mxu0
        %v351 = vadd.f32 %v273, %v350
        %v352 = vpop.f32.mrb[0].mxu0
        %v353 = vadd.f32 %v274, %v352
        %354 = vmatprep.mubr.f32.mxu0 0.0
        %355 = vmatmul.mubr.f32.gmra.mrb[0].mxu0 %v282
        %v356 = vpop.f32.mrb[0].mxu0
        %v357 = vadd.f32 %v275, %v356
        %v358 = vpop.f32.mrb[0].mxu0
        %v359 = vadd.f32 %v276, %v358
        %360 = vdwg.mxu0
        %362 = vset.pattern.permute.xlu0 0
        %363 = vperm.xlu0 %362, %v240
        %v364 = vpop.permute.xlu0 %363
        %367 = vset.pattern.permute.xlu0 0
        %368 = vperm.xlu0 %367, %v241
        %v369 = vpop.permute.xlu0 %368
        %v371 = vadd.f32 %v351, %v364
        %v372 = vadd.f32 %v353, %v364
        %v373 = vadd.f32 %v357, %v369
        %v374 = vadd.f32 %v359, %v369
        %375 = vst [vmem:[%s233] sm:$0xff] %v371
        %376 = vst [vmem:[%s233 + $0x8] sm:$0xff] %v372
        %377 = vst [vmem:[%s233 + $0x10] sm:$0xff] %v373
        %378 = vst [vmem:[%s233 + $0x18] sm:$0xff] %v374
        %s379 = sand.u32 %s134, 1
        %s380 = scalar_lea.sflag [#allocation4], %s379
        %s381 = sand.u32 %s134, 1
        %s382 = smul.addr %s381, 32
        %s383 = scalar_lea.vmem [#allocation5], %s382
        // Predicated region
        $region41: #{tpu_custom_call.1} parent=35 // pred_check
          %p384 = pneg %p144
        $region42: #{tpu_custom_call.1} parent=35 // pred_check_branch
          %386 = sbr.rel (%p384) target = $region44
        $region43: #{tpu_custom_call.1} parent=35 // pred_region
          %s387 = smul.u32 2, %s26
          %s389 = ssub.s32 512, 512
          %390 = vsyncadd %s380, %s389
          %s391 = smul.addr %s25, 4
          %s392 = sadd.s32 %s387, %s391
          %s393 = smul.addr %s392, 128
          %s394 = scalar_lea.hbm %s4, %s393
          %s395 = sshll.u32 %s383, 4
          %s396 = int_to_ptr.vmem [resolvable:$true] %s395
          %401 = dma.vmem_to_hbm [thread:$0]  %s396, 512, %s394, %s380, 256, 256, 16
        $region44: #{tpu_custom_call.1} parent=35 // pred_fallthru
          _
      $region36: #{tpu_custom_call.1} parent=5 // pred_fallthru
        _
      %p402 = scmp.le.s32.totalorder 2, %s16
      // Predicated region
      $region45: #{tpu_custom_call.1} parent=5 // pred_check
        %p403 = pneg %p402
      $region46: #{tpu_custom_call.1} parent=5 // pred_check_branch
        %405 = sbr.rel (%p403) target = $region48
      $region47: #{tpu_custom_call.1} parent=5 // pred_region
        %s406 = ssub.s32 %s16, 2
        // Predicated region
        $region49: #{tpu_custom_call.1} parent=47 // pred_check
          %p407 = pneg %p150
        $region50: #{tpu_custom_call.1} parent=47 // pred_check_branch
          %409 = sbr.rel (%p407) target = $region52
        $region51: #{tpu_custom_call.1} parent=47 // pred_region
          %s410 = sand.u32 %s135, 1
          %s411 = scalar_lea.sflag [#allocation4], %s410
          %s412 = sand.u32 %s135, 1
          %s413 = smul.addr %s412, 32
          %s414 = scalar_lea.vmem [#allocation5], %s413
          %415 = dma.done %s411, 512
        $region52: #{tpu_custom_call.1} parent=47 // pred_fallthru
          _
      $region48: #{tpu_custom_call.1} parent=5 // pred_fallthru
        _
    $region6: #{tpu_custom_call.1} parent=1 // loop_footer
      %s20 = sadd.s32 1, %s16
    $region7: #{tpu_custom_call.1} parent=1 // loop_footer_branch
      %15 = sbr.rel target = $region3
    $region8: #{tpu_custom_call.1} parent=1 // loop_exit
      _
    %416 = vsyncpa [#allocation3], 1
    %s417 = scalar_lea.sflag [#allocation3], 1
    %418 = vsyncpa %s417, 1
    %419 = vsyncpa [#allocation4], 1
    %s420 = scalar_lea.sflag [#allocation4], 1
    %421 = vsyncpa %s420, 1

</llo_original>
